<compile_context>
chip_gen: v6e
topology: v6e:2x2x1
jax: 0.10.0
libtpu: 0.0.40
codegen_flags: <defaults>
</compile_context>

<pallas_src>
import functools

import jax
import jax.numpy as jnp
from jax import lax
from jax.experimental import pallas as pl
from jax.experimental.pallas import tpu as pltpu

EPS = 1e-12  # torch.nn.functional.normalize default eps


def _netvlad_kernel(x_ref, w_ref, cent_ref, bias_ref, out_ref, *,
                    normalize_input=True):
    # x_ref:    (1, B, C, S)  raw (un-normalized) descriptors, NCHW layout, S=H*W
    # w_ref:    (K, C)        conv weight = 2*alpha*centroids (pre-scaled)
    # cent_ref: (K, C)        cluster centroids
    # bias_ref: (K, 1)        conv bias = -alpha * ||centroid||
    # out_ref:  (1, B, K, C)  fully normalized VLAD descriptors
    B = x_ref.shape[1]
    K, C = cent_ref.shape

    x = x_ref[0].astype(jnp.float32)            # (B, C, S)
    w = w_ref[...].astype(jnp.float32)          # (K, C)
    cent = cent_ref[...].astype(jnp.float32)    # (K, C)
    bias = bias_ref[...].astype(jnp.float32)    # (K, 1)

    # 1) descriptor-wise L2 normalization over channels (torch dim=1)
    if normalize_input:
        inv = pl.reciprocal(
            jnp.maximum(jnp.sqrt(jnp.sum(x * x, axis=1, keepdims=True)), EPS),
            approx=False)
        xn = x * inv                             # (B, C, S)
    else:
        xn = x

    # 2) 1x1 conv as one batched MXU matmul:
    #    logits[b,k,s] = sum_c w[k,c] * xn[b,c,s] + bias[k]
    w_b = jnp.broadcast_to(w[None], (B, K, C))   # hoisted; once per grid step
    logits = lax.dot_general(
        w_b, xn,
        dimension_numbers=(((2,), (1,)), ((0,), (0,))),
        preferred_element_type=jnp.float32)      # (B, K, S)
    logits = logits + bias[None, :, :]           # (1, K, 1) broadcast

    # 3) softmax over clusters K (torch dim=1 of (N, K, HW))
    logits = logits - jnp.max(logits, axis=1, keepdims=True)
    e = jnp.exp(logits)
    a = e * pl.reciprocal(jnp.sum(e, axis=1, keepdims=True), approx=False)

    # 4) VLAD aggregation without materializing the (B, K, C, S) residual:
    #    vlad[b,k,c] = sum_s a[b,k,s]*xn[b,c,s] - cent[k,c] * sum_s a[b,k,s]
    vlad = lax.dot_general(
        a, xn,
        dimension_numbers=(((2,), (2,)), ((0,), (0,))),
        preferred_element_type=jnp.float32)      # (B, K, C)
    a_sum = jnp.sum(a, axis=2, keepdims=True)    # (B, K, 1)
    vlad = vlad - a_sum * cent[None, :, :]

    # 5) intra-normalization over the descriptor dim C (torch dim=2)
    inv_intra = pl.reciprocal(
        jnp.maximum(jnp.sqrt(jnp.sum(vlad * vlad, axis=2, keepdims=True)), EPS),
        approx=False)
    vlad = vlad * inv_intra

    # 6) global L2 normalization over the flattened (K*C) vector (torch dim=1)
    sq = jnp.sum(vlad * vlad, axis=2, keepdims=True)     # (B, K, 1)
    gsq = jnp.sum(sq, axis=1, keepdims=True)             # (B, 1, 1)
    inv_g = pl.reciprocal(jnp.maximum(jnp.sqrt(gsq), EPS), approx=False)
    vlad = vlad * inv_g

    out_ref[0] = vlad.astype(out_ref.dtype)


def netvlad_forward(x_nchw, centroids, alpha=100.0, b_tile=None,
                    normalize_input=True):
    """x_nchw: (N, C, H, W) float32. Returns (N, K*C) VLAD descriptors."""
    N, C, H, W = x_nchw.shape
    K, Cc = centroids.shape
    assert Cc == C
    S = H * W

    if b_tile is None:
        b_tile = next(b for b in (8, 4, 2, 1) if N % b == 0)
    assert N % b_tile == 0
    G = N // b_tile

    # loop-invariant 1x1-conv parameters, hoisted out of the kernel
    w = (2.0 * alpha) * centroids                                    # (K, C)
    bias = (-alpha * jnp.linalg.norm(centroids, axis=1)).reshape(K, 1)

    # keep NCHW layout: only a free reshape, no transpose / extra HBM pass
    x = x_nchw.reshape(G, b_tile, C, S)

    kernel = functools.partial(_netvlad_kernel,
                               normalize_input=normalize_input)

    out = pl.pallas_call(
        kernel,
        out_shape=jax.ShapeDtypeStruct((G, b_tile, K, C), jnp.float32),
        grid_spec=pltpu.PrefetchScalarGridSpec(
            num_scalar_prefetch=0,
            grid=(G,),
            in_specs=[
                pl.BlockSpec((1, b_tile, C, S), lambda g: (g, 0, 0, 0)),
                pl.BlockSpec((K, C), lambda g: (0, 0)),
                pl.BlockSpec((K, C), lambda g: (0, 0)),
                pl.BlockSpec((K, 1), lambda g: (0, 0)),
            ],
            out_specs=pl.BlockSpec((1, b_tile, K, C),
                                   lambda g: (g, 0, 0, 0)),
        ),
        compiler_params=pltpu.CompilerParams(
            dimension_semantics=("parallel",)),
    )(x, w, centroids, bias)

    # (G, B, K, C) -> (N, K*C): contiguous row-major reshape, free in the wrapper
    return out.reshape(N, K * C)


def netvlad_reference(x_nchw, centroids, alpha=100.0):
    """Pure-JAX reference mirroring the PyTorch forward, for validation."""
    N, C, H, W = x_nchw.shape
    x = x_nchw / jnp.maximum(
        jnp.linalg.norm(x_nchw, axis=1, keepdims=True), EPS)
    x_flat = x.reshape(N, C, -1)                                   # (N, C, S)
    logits = jnp.einsum("ncs,kc->nks", x_flat, 2.0 * alpha * centroids)
    # bias = -alpha * ||centroid|| matches the PyTorch module (centroids.norm(dim=1))
    logits = logits + (-alpha * jnp.linalg.norm(centroids, axis=1))[None, :, None]
    a = jax.nn.softmax(logits, axis=1)                             # (N, K, S)
    residual = x_flat[:, None, :, :] - centroids[None, :, :, None]
    vlad = jnp.sum(residual * a[:, :, None, :], axis=-1)           # (N, K, C)
    vlad = vlad / jnp.maximum(
        jnp.linalg.norm(vlad, axis=2, keepdims=True), EPS)
    vlad = vlad.reshape(N, -1)
    vlad = vlad / jnp.maximum(
        jnp.linalg.norm(vlad, axis=1, keepdims=True), EPS)
    return vlad


if __name__ == "__main__":
    # Small shapes consistent with the module: batch=2, dim(C)=32,
    # num_clusters(K)=16, spatial 8x8.
    N, C, H, W = 2, 32, 8, 8
    K = 16
    ALPHA = 100.0

    key = jax.random.PRNGKey(0)
    kx, kc = jax.random.split(key)
    x = jax.random.normal(kx, (N, C, H, W), dtype=jnp.float32)
    # torch.rand -> uniform [0, 1)
    centroids = jax.random.uniform(kc, (K, C), dtype=jnp.float32)

    out = netvlad_forward(x, centroids, alpha=ALPHA)
    out = jax.block_until_ready(out)

    ref = netvlad_reference(x, centroids, alpha=ALPHA)
    assert out.shape == (N, K * C)
    assert jnp.allclose(out, ref, atol=1e-5, rtol=1e-5)

    print("KERNEL_OK")
</pallas_src>

<mosaic_0001>
module attributes {stable_mosaic.version = 11 : i64} {
  func.func @_netvlad_kernel(%arg0: i32, %arg1: memref<1x2x32x64xf32, #tpu.memory_space<vmem>>, %arg2: memref<16x32xf32, #tpu.memory_space<vmem>>, %arg3: memref<16x32xf32, #tpu.memory_space<vmem>>, %arg4: memref<16x1xf32, #tpu.memory_space<vmem>>, %arg5: memref<1x2x16x32xf32, #tpu.memory_space<vmem>>) attributes {dimension_semantics = [#tpu.dimension_semantics<parallel>], iteration_bounds = array<i64: 1>, scalar_prefetch = 0 : i64, scratch_operands = 0 : i64, tpu.core_type = #tpu.core_type<tc>, window_params = [{transform_indices = @transform_0, window_bounds = array<i64: 1, 2, 32, 64>}, {pipeline_mode = #tpu.pipeline_mode<synchronous>, transform_indices = @transform_1, window_bounds = array<i64: 16, 32>}, {pipeline_mode = #tpu.pipeline_mode<synchronous>, transform_indices = @transform_2, window_bounds = array<i64: 16, 32>}, {pipeline_mode = #tpu.pipeline_mode<synchronous>, transform_indices = @transform_3, window_bounds = array<i64: 16, 1>}, {transform_indices = @transform_4, window_bounds = array<i64: 1, 2, 16, 32>}]} {
    %c0 = arith.constant 0 : index
    %c0_0 = arith.constant 0 : index
    %c0_1 = arith.constant 0 : index
    %c0_2 = arith.constant 0 : index
    %0 = vector.load %arg1[%c0, %c0_0, %c0_1, %c0_2] : memref<1x2x32x64xf32, #tpu.memory_space<vmem>>, vector<1x2x32x64xf32>
    %1 = vector.shape_cast %0 : vector<1x2x32x64xf32> to vector<2x32x64xf32>
    %c0_3 = arith.constant 0 : index
    %c0_4 = arith.constant 0 : index
    %2 = vector.load %arg2[%c0_3, %c0_4] : memref<16x32xf32, #tpu.memory_space<vmem>>, vector<16x32xf32>
    %c0_5 = arith.constant 0 : index
    %c0_6 = arith.constant 0 : index
    %3 = vector.load %arg3[%c0_5, %c0_6] : memref<16x32xf32, #tpu.memory_space<vmem>>, vector<16x32xf32>
    %c0_7 = arith.constant 0 : index
    %c0_8 = arith.constant 0 : index
    %4 = vector.load %arg4[%c0_7, %c0_8] : memref<16x1xf32, #tpu.memory_space<vmem>>, vector<16x1xf32>
    %5 = arith.mulf %1, %1 : vector<2x32x64xf32>
    %cst = arith.constant dense<0.000000e+00> : vector<2x64xf32>
    %6 = vector.multi_reduction <add>, %5, %cst [1] : vector<2x32x64xf32> to vector<2x64xf32>
    %7 = vector.shape_cast %6 : vector<2x64xf32> to vector<2x1x64xf32>
    %8 = math.sqrt %7 : vector<2x1x64xf32>
    %cst_9 = arith.constant 9.99999996E-13 : f32
    %9 = vector.broadcast %cst_9 : f32 to vector<2x1x64xf32>
    %10 = arith.maximumf %8, %9 : vector<2x1x64xf32>
    %11 = tpu.reciprocal %10 : vector<2x1x64xf32> -> vector<2x1x64xf32>
    %12 = vector.broadcast %11 : vector<2x1x64xf32> to vector<2x32x64xf32>
    %13 = arith.mulf %1, %12 : vector<2x32x64xf32>
    %14 = vector.shape_cast %2 : vector<16x32xf32> to vector<1x16x32xf32>
    %15 = vector.shape_cast %14 : vector<1x16x32xf32> to vector<1x16x32xf32>
    %16 = vector.broadcast %15 : vector<1x16x32xf32> to vector<2x16x32xf32>
    %cst_10 = arith.constant dense<0.000000e+00> : vector<2x16x64xf32>
    %17 = tpu.matmul %16, %13, %cst_10 {dimension_numbers = #tpu.dot_dimension_numbers<[2], [1], [1], [2], [0, 0, 0, 1, 1, 2], [0], [0]>} : vector<2x16x32xf32>, vector<2x32x64xf32>, vector<2x16x64xf32> -> vector<2x16x64xf32>
    %18 = vector.shape_cast %4 : vector<16x1xf32> to vector<1x16x1xf32>
    %19 = vector.broadcast %18 : vector<1x16x1xf32> to vector<2x16x64xf32>
    %20 = arith.addf %17, %19 : vector<2x16x64xf32>
    %cst_11 = arith.constant dense<0xFF800000> : vector<2x64xf32>
    %21 = vector.multi_reduction <maximumf>, %20, %cst_11 [1] : vector<2x16x64xf32> to vector<2x64xf32>
    %22 = vector.shape_cast %21 : vector<2x64xf32> to vector<2x1x64xf32>
    %23 = vector.broadcast %22 : vector<2x1x64xf32> to vector<2x16x64xf32>
    %24 = arith.subf %20, %23 : vector<2x16x64xf32>
    %25 = math.exp %24 : vector<2x16x64xf32>
    %cst_12 = arith.constant dense<0.000000e+00> : vector<2x64xf32>
    %26 = vector.multi_reduction <add>, %25, %cst_12 [1] : vector<2x16x64xf32> to vector<2x64xf32>
    %27 = vector.shape_cast %26 : vector<2x64xf32> to vector<2x1x64xf32>
    %28 = tpu.reciprocal %27 : vector<2x1x64xf32> -> vector<2x1x64xf32>
    %29 = vector.broadcast %28 : vector<2x1x64xf32> to vector<2x16x64xf32>
    %30 = arith.mulf %25, %29 : vector<2x16x64xf32>
    %cst_13 = arith.constant dense<0.000000e+00> : vector<2x16x32xf32>
    %31 = tpu.matmul %30, %13, %cst_13 {dimension_numbers = #tpu.dot_dimension_numbers<[2], [2], [1], [1], [0, 0, 0, 1, 1, 1], [0], [0]>} : vector<2x16x64xf32>, vector<2x32x64xf32>, vector<2x16x32xf32> -> vector<2x16x32xf32>
    %cst_14 = arith.constant dense<0.000000e+00> : vector<2x16xf32>
    %32 = vector.multi_reduction <add>, %30, %cst_14 [2] : vector<2x16x64xf32> to vector<2x16xf32>
    %33 = vector.shape_cast %32 : vector<2x16xf32> to vector<2x16x1xf32>
    %34 = vector.shape_cast %3 : vector<16x32xf32> to vector<1x16x32xf32>
    %35 = vector.broadcast %33 : vector<2x16x1xf32> to vector<2x16x32xf32>
    %36 = vector.broadcast %34 : vector<1x16x32xf32> to vector<2x16x32xf32>
    %37 = arith.mulf %35, %36 : vector<2x16x32xf32>
    %38 = arith.subf %31, %37 : vector<2x16x32xf32>
    %39 = arith.mulf %38, %38 : vector<2x16x32xf32>
    %cst_15 = arith.constant dense<0.000000e+00> : vector<2x16xf32>
    %40 = vector.multi_reduction <add>, %39, %cst_15 [2] : vector<2x16x32xf32> to vector<2x16xf32>
    %41 = vector.shape_cast %40 : vector<2x16xf32> to vector<2x16x1xf32>
    %42 = math.sqrt %41 : vector<2x16x1xf32>
    %cst_16 = arith.constant 9.99999996E-13 : f32
    %43 = vector.broadcast %cst_16 : f32 to vector<2x16x1xf32>
    %44 = arith.maximumf %42, %43 : vector<2x16x1xf32>
    %45 = tpu.reciprocal %44 : vector<2x16x1xf32> -> vector<2x16x1xf32>
    %46 = vector.broadcast %45 : vector<2x16x1xf32> to vector<2x16x32xf32>
    %47 = arith.mulf %38, %46 : vector<2x16x32xf32>
    %48 = arith.mulf %47, %47 : vector<2x16x32xf32>
    %cst_17 = arith.constant dense<0.000000e+00> : vector<2x16xf32>
    %49 = vector.multi_reduction <add>, %48, %cst_17 [2] : vector<2x16x32xf32> to vector<2x16xf32>
    %50 = vector.shape_cast %49 : vector<2x16xf32> to vector<2x16x1xf32>
    %cst_18 = arith.constant dense<0.000000e+00> : vector<2x1xf32>
    %51 = vector.multi_reduction <add>, %50, %cst_18 [1] : vector<2x16x1xf32> to vector<2x1xf32>
    %52 = vector.shape_cast %51 : vector<2x1xf32> to vector<2x1x1xf32>
    %53 = math.sqrt %52 : vector<2x1x1xf32>
    %cst_19 = arith.constant 9.99999996E-13 : f32
    %54 = vector.broadcast %cst_19 : f32 to vector<2x1x1xf32>
    %55 = arith.maximumf %53, %54 : vector<2x1x1xf32>
    %56 = tpu.reciprocal %55 : vector<2x1x1xf32> -> vector<2x1x1xf32>
    %57 = vector.broadcast %56 : vector<2x1x1xf32> to vector<2x16x32xf32>
    %58 = arith.mulf %47, %57 : vector<2x16x32xf32>
    %c0_20 = arith.constant 0 : index
    %c0_21 = arith.constant 0 : index
    %c0_22 = arith.constant 0 : index
    %c0_23 = arith.constant 0 : index
    %59 = vector.load %arg5[%c0_20, %c0_21, %c0_22, %c0_23] : memref<1x2x16x32xf32, #tpu.memory_space<vmem>>, vector<1x2x16x32xf32>
    %60 = vector.shape_cast %59 : vector<1x2x16x32xf32> to vector<2x16x32xf32>
    %61 = vector.shape_cast %58 : vector<2x16x32xf32> to vector<1x2x16x32xf32>
    tpu.vector_store %arg5[%c0_20, %c0_21, %c0_22, %c0_23], %61 {strides = array<i32>} : memref<1x2x16x32xf32, #tpu.memory_space<vmem>>, vector<1x2x16x32xf32>,
    return
  }
  func.func @transform_0(%arg0: i32) -> (i32, i32, i32, i32) {
    %c0_i32 = arith.constant 0 : i32
    %c0_i32_0 = arith.constant 0 : i32
    %c0_i32_1 = arith.constant 0 : i32
    %c0_i32_2 = arith.constant 0 : i32
    return %arg0, %c0_i32, %c0_i32_0, %c0_i32_1 : i32, i32, i32, i32
  }
  func.func @transform_1(%arg0: i32) -> (i32, i32) {
    %c0_i32 = arith.constant 0 : i32
    %c0_i32_0 = arith.constant 0 : i32
    %c0_i32_1 = arith.constant 0 : i32
    return %c0_i32, %c0_i32_0 : i32, i32
  }
  func.func @transform_2(%arg0: i32) -> (i32, i32) {
    %c0_i32 = arith.constant 0 : i32
    %c0_i32_0 = arith.constant 0 : i32
    %c0_i32_1 = arith.constant 0 : i32
    return %c0_i32, %c0_i32_0 : i32, i32
  }
  func.func @transform_3(%arg0: i32) -> (i32, i32) {
    %c0_i32 = arith.constant 0 : i32
    %c0_i32_0 = arith.constant 0 : i32
    %c0_i32_1 = arith.constant 0 : i32
    return %c0_i32, %c0_i32_0 : i32, i32
  }
  func.func @transform_4(%arg0: i32) -> (i32, i32, i32, i32) {
    %c0_i32 = arith.constant 0 : i32
    %c0_i32_0 = arith.constant 0 : i32
    %c0_i32_1 = arith.constant 0 : i32
    %c0_i32_2 = arith.constant 0 : i32
    return %arg0, %c0_i32, %c0_i32_0, %c0_i32_1 : i32, i32, i32, i32
  }
}

</mosaic_0001>

<llo_original>
// kernel: tpu_custom_call.1
$region0: #{tpu_custom_call.1}
  #allocation0 [shape = 'u32[]', space=smem, size = 0x4, offset = 0x4, fixed_abs, tag = 'smem constant byte address 0x4 - core index']
  #allocation1 [shape = 'u32[144,128]{1,0:T(1,128)}', space=vmem, size = 0x12000, scoped, tag = 'internal scratch']
  %s0 = inlined_call_operand.hbm [shape: f32[1,2,32,64], index: 0, kind: input, shape index: {}]
  %s1 = inlined_call_operand.vmem [shape: f32[16,32], index: 1, kind: input, shape index: {}]
  %s2 = inlined_call_operand.hbm [shape: f32[16,32], index: 2, kind: input, shape index: {}]
  %s3 = inlined_call_operand.vmem [shape: f32[16,1], index: 3, kind: input, shape index: {}]
  %s4 = inlined_call_operand.hbm [shape: f32[1,2,16,32], index: 4, kind: output, shape index: {}]
  %s5 = sld [smem:[#allocation0]]
  $region34: #{tpu_custom_call.1} parent=0
    _
  %s7 = ssub.s32 1, %s5
  %s8 = scalar_select 0, %s7, %s5
  $region1: #{tpu_custom_call.1} parent=0
    #allocation2 [shape = 'u8[32768]{0}', space=vmem, size = 0x8000, scoped, tag = 'input window, operand 0, single buffered']
    #allocation3 [shape = 's32[1]{0}', space=sflag, size = 0x4, scoped, tag = 'scoped memory for tpu_custom_call.1']
    #allocation4 [shape = 's32[1]{0}', space=sflag, size = 0x4, scoped, tag = 'scoped memory for tpu_custom_call.1']
    #allocation5 [shape = 'u8[8192]{0}', space=vmem, size = 0x2000, scoped, tag = 'input window, operand 2, single buffered']
    #allocation6 [shape = 's32[1]{0}', space=sflag, size = 0x4, scoped, tag = 'scoped memory for tpu_custom_call.1']
    #allocation7 [shape = 'u8[16384]{0}', space=vmem, size = 0x4000, scoped, tag = 'output window, operand 0, single buffered']
    %9 = vsyncpa [#allocation3], 0
    %10 = vsyncpa [#allocation6], 0
    %11 = vsyncpa [#allocation4], 0
    // Predicated region
    $region2: #{tpu_custom_call.1} parent=1 // pred_check
      _
    $region3: #{tpu_custom_call.1} parent=1 // pred_check_branch
      %13 = sbr.rel (0) target = $region5
    $region4: #{tpu_custom_call.1} parent=1 // pred_region
      %s15 = ssub.s32 1024, 1024
      %16 = vsyncadd [#allocation3], %s15
      %s17 = sshll.u32 [#allocation2], 4
      %s18 = int_to_ptr.vmem [resolvable:$true] %s17
      %23 = dma.hbm_to_vmem [thread:$0]  %s0, 1024, %s18, [#allocation3], 128, 128, 8
    $region5: #{tpu_custom_call.1} parent=1 // pred_fallthru
      _
    // Predicated region
    $region6: #{tpu_custom_call.1} parent=1 // pred_check
      _
    $region7: #{tpu_custom_call.1} parent=1 // pred_check_branch
      %25 = sbr.rel (0) target = $region9
    $region8: #{tpu_custom_call.1} parent=1 // pred_region
      _
    $region9: #{tpu_custom_call.1} parent=1 // pred_fallthru
      _
    // Predicated region
    $region10: #{tpu_custom_call.1} parent=1 // pred_check
      _
    $region11: #{tpu_custom_call.1} parent=1 // pred_check_branch
      %27 = sbr.rel (0) target = $region13
    $region12: #{tpu_custom_call.1} parent=1 // pred_region
      %s29 = ssub.s32 256, 256
      %30 = vsyncadd [#allocation6], %s29
      %s31 = sshll.u32 [#allocation5], 4
      %s32 = int_to_ptr.vmem [resolvable:$true] %s31
      %37 = dma.hbm_to_vmem [thread:$0]  %s2, 256, %s32, [#allocation6], 128, 128, 8
    $region13: #{tpu_custom_call.1} parent=1 // pred_fallthru
      _
    // Predicated region
    $region14: #{tpu_custom_call.1} parent=1 // pred_check
      _
    $region15: #{tpu_custom_call.1} parent=1 // pred_check_branch
      %39 = sbr.rel (0) target = $region17
    $region16: #{tpu_custom_call.1} parent=1 // pred_region
      _
    $region17: #{tpu_custom_call.1} parent=1 // pred_fallthru
      _
    // Predicated region
    $region18: #{tpu_custom_call.1} parent=1 // pred_check
      _
    $region19: #{tpu_custom_call.1} parent=1 // pred_check_branch
      %41 = sbr.rel (0) target = $region21
    $region20: #{tpu_custom_call.1} parent=1 // pred_region
      %42 = dma.done [#allocation3], 1024
    $region21: #{tpu_custom_call.1} parent=1 // pred_fallthru
      _
    // Predicated region
    $region22: #{tpu_custom_call.1} parent=1 // pred_check
      _
    $region23: #{tpu_custom_call.1} parent=1 // pred_check_branch
      %44 = sbr.rel (0) target = $region25
    $region24: #{tpu_custom_call.1} parent=1 // pred_region
      %45 = dma.done [#allocation6], 256
    $region25: #{tpu_custom_call.1} parent=1 // pred_fallthru
      _
    %v46 = vld [vmem:[#allocation2] sm:$0xff]
    %v47 = vld [vmem:[#allocation2 + $0x8] sm:$0xff]
    %v48 = vld [vmem:[#allocation2 + $0x10] sm:$0xff]
    %v49 = vld [vmem:[#allocation2 + $0x18] sm:$0xff]
    %v50 = vld [vmem:[#allocation2 + $0x20] sm:$0xff]
    %v51 = vld [vmem:[#allocation2 + $0x28] sm:$0xff]
    %v52 = vld [vmem:[#allocation2 + $0x30] sm:$0xff]
    %v53 = vld [vmem:[#allocation2 + $0x38] sm:$0xff]
    %v54 = vld [vmem:[%s1] sm:$0xff]
    %v55 = vld [vmem:[%s1 + $0x8] sm:$0xff]
    %v56 = vld [vmem:[#allocation5] sm:$0xff]
    %v57 = vld [vmem:[#allocation5 + $0x8] sm:$0xff]
    %v58 = vld [vmem:[%s3] sm:$0xff]
    %v59 = vld [vmem:[%s3 + $0x8] sm:$0xff]
    %v60 = vmul.f32 %v46, %v46
    %v61 = vmul.f32 %v47, %v47
    %v62 = vmul.f32 %v48, %v48
    %v63 = vmul.f32 %v49, %v49
    %v64 = vmul.f32 %v50, %v50
    %v65 = vmul.f32 %v51, %v51
    %v66 = vmul.f32 %v52, %v52
    %v67 = vmul.f32 %v53, %v53
    %vm68 = vcmask 523264
    %v69 = vsel %vm68, %v60, 0.0
    %v70 = vsel %vm68, %v61, 0.0
    %v71 = vadd.f32 %v69, %v70
    %v72 = vsel %vm68, %v62, 0.0
    %v73 = vadd.f32 %v71, %v72
    %v74 = vsel %vm68, %v63, 0.0
    %v75 = vadd.f32 %v73, %v74
    %v76 = vrot.slane %v75, 4
    %v77 = vadd.f32 %v75, %v76
    %v78 = vrot.slane %v77, 2
    %v79 = vadd.f32 %v77, %v78
    %v80 = vrot.slane %v79, 1
    %v81 = vadd.f32 %v79, %v80
    %v82 = vsel %vm68, %v64, 0.0
    %v83 = vsel %vm68, %v65, 0.0
    %v84 = vadd.f32 %v82, %v83
    %v85 = vsel %vm68, %v66, 0.0
    %v86 = vadd.f32 %v84, %v85
    %v87 = vsel %vm68, %v67, 0.0
    %v88 = vadd.f32 %v86, %v87
    %v89 = vrot.slane %v88, 4
    %v90 = vadd.f32 %v88, %v89
    %v91 = vrot.slane %v90, 2
    %v92 = vadd.f32 %v90, %v91
    %v93 = vrot.slane %v92, 1
    %v94 = vadd.f32 %v92, %v93
    %v95 = vrsqrt.pop %v81
    %v96 = vmul.f32 %v81, %v95
    %vm97 = vcmp.eq.f32.partialorder %v81, inf
    %v98 = vsel %vm97, %v81, %v96
    %vm99 = vcmp.eq.f32.partialorder %v81, 0.0
    %v100 = vand.u32 %v81, 2147483648
    %v101 = vsel %vm99, %v100, %v98
    %v102 = vrsqrt.pop %v94
    %v103 = vmul.f32 %v94, %v102
    %vm104 = vcmp.eq.f32.partialorder %v94, inf
    %v105 = vsel %vm104, %v94, %v103
    %vm106 = vcmp.eq.f32.partialorder %v94, 0.0
    %v107 = vand.u32 %v94, 2147483648
    %v108 = vsel %vm106, %v107, %v105
    %v109 = vmax.f32 %v101, 1e-12
    %v110 = vmax.f32 %v108, 1e-12
    %v111 = vrcp.pop %v109
    %v112 = vrcp.pop %v110
    %v113 = vmul.f32 %v46, %v111
    %v114 = vmul.f32 %v47, %v111
    %v115 = vmul.f32 %v48, %v111
    %v116 = vmul.f32 %v49, %v111
    %v117 = vmul.f32 %v50, %v112
    %v118 = vmul.f32 %v51, %v112
    %v119 = vmul.f32 %v52, %v112
    %v120 = vmul.f32 %v53, %v112
    %122 = vset.pattern.permute.xlu0 0
    %123 = vperm.xlu0 %122, %v58
    %v124 = vpop.permute.xlu0 %123
    %127 = vset.pattern.permute.xlu0 0
    %128 = vperm.xlu0 %127, %v59
    %v129 = vpop.permute.xlu0 %128
    %vm131 = vcmask 261120
    %v133 = vsel %vm131, %v54, 0
    %v136 = vsel %vm131, %v55, 0
    %138 = vmatprep.subr.mxu0 0.0
    %139 = vmatpush1.msra.mxu0 0.0
    %140 = vmatprep.subr.mxu0 0.0
    %141 = vmatpush1.msra.mxu0 0.0
    %142 = vmatprep.subr.mxu0 0.0
    %143 = vmatpush1.msra.mxu0 0.0
    %144 = vmatprep.subr.mxu0 0.0
    %145 = vmatpush1.msra.mxu0 0.0
    %146 = vmatprep.subr.mxu0 0.0
    %147 = vmatpush1.msra.mxu0 0.0
    %148 = vmatprep.subr.mxu0 0.0
    %149 = vmatpush1.msra.mxu0 0.0
    %150 = vmatprep.subr.mxu0 0.0
    %151 = vmatpush1.msra.mxu0 0.0
    %152 = vmatprep.subr.mxu0 0.0
    %153 = vmatpush1.msra.mxu0 0.0
    %154 = vmatprep.subr.mxu0 0.0
    %155 = vmatpush1.msra.mxu0 0.0
    %156 = vmatprep.subr.mxu0 0.0
    %157 = vmatpush1.msra.mxu0 0.0
    %158 = vmatprep.subr.mxu0 0.0
    %159 = vmatpush1.msra.mxu0 0.0
    %160 = vmatprep.subr.mxu0 0.0
    %161 = vmatpush1.msra.mxu0 0.0
    %162 = vmatprep.subr.mxu0 0.0
    %163 = vmatpush1.msra.mxu0 %v116
    %164 = vmatprep.subr.mxu0 0.0
    %165 = vmatpush1.msra.mxu0 %v115
    %166 = vmatprep.subr.mxu0 0.0
    %167 = vmatpush1.msra.mxu0 %v114
    %168 = vmatprep.subr.mxu0 0.0
    %169 = vmatpush1.msra.mxu0 %v113
    %170 = vmatprep.subr.mxu0 0.0
    %171 = vmatpush2.msra.mxu0 0.0
    %172 = vmatprep.subr.mxu0 0.0
    %173 = vmatpush2.msra.mxu0 0.0
    %174 = vmatprep.subr.mxu0 0.0
    %175 = vmatpush2.msra.mxu0 0.0
    %176 = vmatprep.subr.mxu0 0.0
    %177 = vmatpush2.msra.mxu0 0.0
    %178 = vmatprep.subr.mxu0 0.0
    %179 = vmatpush2.msra.mxu0 0.0
    %180 = vmatprep.subr.mxu0 0.0
    %181 = vmatpush2.msra.mxu0 0.0
    %182 = vmatprep.subr.mxu0 0.0
    %183 = vmatpush2.msra.mxu0 0.0
    %184 = vmatprep.subr.mxu0 0.0
    %185 = vmatpush2.msra.mxu0 0.0
    %186 = vmatprep.subr.mxu0 0.0
    %187 = vmatpush2.msra.mxu0 0.0
    %188 = vmatprep.subr.mxu0 0.0
    %189 = vmatpush2.msra.mxu0 0.0
    %190 = vmatprep.subr.mxu0 0.0
    %191 = vmatpush2.msra.mxu0 0.0
    %192 = vmatprep.subr.mxu0 0.0
    %193 = vmatpush2.msra.mxu0 0.0
    %194 = vmatprep.subr.mxu0 0.0
    %195 = vmatpush2.msra.mxu0 0.0
    %196 = vmatprep.subr.mxu0 0.0
    %197 = vmatpush2.msra.mxu0 0.0
    %198 = vmatprep.subr.mxu0 0.0
    %199 = vmatpush2.msra.mxu0 0.0
    %200 = vmatprep.subr.mxu0 0.0
    %201 = vmatpush2.msra.mxu0 0.0
    %202 = vmatprep.mubr.f32.mxu0 0.0
    %203 = vmatmul.mubr.f32.gmra.mxu0 %v133
    %v204 = vpop.f32.mrf.mxu0
    %v205 = vadd.f32 %v124, %v204
    %v206 = vpop.f32.mrf.mxu0
    %207 = vmatprep.mubr.f32.mxu0 0.0
    %208 = vmatmul.mubr.f32.gmra.mxu0 %v136
    %v209 = vpop.f32.mrf.mxu0
    %v210 = vadd.f32 %v129, %v209
    %v211 = vpop.f32.mrf.mxu0
    %212 = vdwg.mxu0
    %213 = vmatprep.subr.mxu0 0.0
    %214 = vmatpush1.msra.mxu0 0.0
    %215 = vmatprep.subr.mxu0 0.0
    %216 = vmatpush1.msra.mxu0 0.0
    %217 = vmatprep.subr.mxu0 0.0
    %218 = vmatpush1.msra.mxu0 0.0
    %219 = vmatprep.subr.mxu0 0.0
    %220 = vmatpush1.msra.mxu0 0.0
    %221 = vmatprep.subr.mxu0 0.0
    %222 = vmatpush1.msra.mxu0 0.0
    %223 = vmatprep.subr.mxu0 0.0
    %224 = vmatpush1.msra.mxu0 0.0
    %225 = vmatprep.subr.mxu0 0.0
    %226 = vmatpush1.msra.mxu0 0.0
    %227 = vmatprep.subr.mxu0 0.0
    %228 = vmatpush1.msra.mxu0 0.0
    %229 = vmatprep.subr.mxu0 0.0
    %230 = vmatpush1.msra.mxu0 0.0
    %231 = vmatprep.subr.mxu0 0.0
    %232 = vmatpush1.msra.mxu0 0.0
    %233 = vmatprep.subr.mxu0 0.0
    %234 = vmatpush1.msra.mxu0 0.0
    %235 = vmatprep.subr.mxu0 0.0
    %236 = vmatpush1.msra.mxu0 0.0
    %237 = vmatprep.subr.mxu0 0.0
    %238 = vmatpush1.msra.mxu0 %v120
    %239 = vmatprep.subr.mxu0 0.0
    %240 = vmatpush1.msra.mxu0 %v119
    %241 = vmatprep.subr.mxu0 0.0
    %242 = vmatpush1.msra.mxu0 %v118
    %243 = vmatprep.subr.mxu0 0.0
    %244 = vmatpush1.msra.mxu0 %v117
    %245 = vmatprep.subr.mxu0 0.0
    %246 = vmatpush2.msra.mxu0 0.0
    %247 = vmatprep.subr.mxu0 0.0
    %248 = vmatpush2.msra.mxu0 0.0
    %249 = vmatprep.subr.mxu0 0.0
    %250 = vmatpush2.msra.mxu0 0.0
    %251 = vmatprep.subr.mxu0 0.0
    %252 = vmatpush2.msra.mxu0 0.0
    %253 = vmatprep.subr.mxu0 0.0
    %254 = vmatpush2.msra.mxu0 0.0
    %255 = vmatprep.subr.mxu0 0.0
    %256 = vmatpush2.msra.mxu0 0.0
    %257 = vmatprep.subr.mxu0 0.0
    %258 = vmatpush2.msra.mxu0 0.0
    %259 = vmatprep.subr.mxu0 0.0
    %260 = vmatpush2.msra.mxu0 0.0
    %261 = vmatprep.subr.mxu0 0.0
    %262 = vmatpush2.msra.mxu0 0.0
    %263 = vmatprep.subr.mxu0 0.0
    %264 = vmatpush2.msra.mxu0 0.0
    %265 = vmatprep.subr.mxu0 0.0
    %266 = vmatpush2.msra.mxu0 0.0
    %267 = vmatprep.subr.mxu0 0.0
    %268 = vmatpush2.msra.mxu0 0.0
    %269 = vmatprep.subr.mxu0 0.0
    %270 = vmatpush2.msra.mxu0 0.0
    %271 = vmatprep.subr.mxu0 0.0
    %272 = vmatpush2.msra.mxu0 0.0
    %273 = vmatprep.subr.mxu0 0.0
    %274 = vmatpush2.msra.mxu0 0.0
    %275 = vmatprep.subr.mxu0 0.0
    %276 = vmatpush2.msra.mxu0 0.0
    %277 = vmatprep.mubr.f32.mxu0 0.0
    %278 = vmatmul.mubr.f32.gmra.mxu0 %v133
    %v279 = vpop.f32.mrf.mxu0
    %v280 = vadd.f32 %v124, %v279
    %v281 = vpop.f32.mrf.mxu0
    %282 = vmatprep.mubr.f32.mxu0 0.0
    %283 = vmatmul.mubr.f32.gmra.mxu0 %v136
    %v284 = vpop.f32.mrf.mxu0
    %v285 = vadd.f32 %v129, %v284
    %v286 = vpop.f32.mrf.mxu0
    %287 = vdwg.mxu0
    %v288 = vsel %vm68, %v205, -inf
    %v289 = vsel %vm68, %v210, -inf
    %v290 = vmax.f32 %v288, %v289
    %v291 = vrot.slane %v290, 4
    %v292 = vmax.f32 %v290, %v291
    %v293 = vrot.slane %v292, 2
    %v294 = vmax.f32 %v292, %v293
    %v295 = vrot.slane %v294, 1
    %v296 = vmax.f32 %v294, %v295
    %v297 = vsel %vm68, %v280, -inf
    %v298 = vsel %vm68, %v285, -inf
    %v299 = vmax.f32 %v297, %v298
    %v300 = vrot.slane %v299, 4
    %v301 = vmax.f32 %v299, %v300
    %v302 = vrot.slane %v301, 2
    %v303 = vmax.f32 %v301, %v302
    %v304 = vrot.slane %v303, 1
    %v305 = vmax.f32 %v303, %v304
    %v306 = vsub.f32 %v205, %v296
    %v307 = vsub.f32 %v210, %v296
    %v308 = vsub.f32 %v280, %v305
    %v309 = vsub.f32 %v285, %v305
    %v310 = vmul.f32 %v306, 1.442695
    %v311 = vpow.pop %v310
    %v312 = vmul.f32 %v307, 1.442695
    %v313 = vpow.pop %v312
    %v314 = vmul.f32 %v308, 1.442695
    %v315 = vpow.pop %v314
    %v316 = vmul.f32 %v309, 1.442695
    %v317 = vpow.pop %v316
    %v318 = vsel %vm68, %v311, 0.0
    %v319 = vsel %vm68, %v313, 0.0
    %v320 = vadd.f32 %v318, %v319
    %v321 = vrot.slane %v320, 4
    %v322 = vadd.f32 %v320, %v321
    %v323 = vrot.slane %v322, 2
    %v324 = vadd.f32 %v322, %v323
    %v325 = vrot.slane %v324, 1
    %v326 = vadd.f32 %v324, %v325
    %v327 = vsel %vm68, %v315, 0.0
    %v328 = vsel %vm68, %v317, 0.0
    %v329 = vadd.f32 %v327, %v328
    %v330 = vrot.slane %v329, 4
    %v331 = vadd.f32 %v329, %v330
    %v332 = vrot.slane %v331, 2
    %v333 = vadd.f32 %v331, %v332
    %v334 = vrot.slane %v333, 1
    %v335 = vadd.f32 %v333, %v334
    %v336 = vrcp.pop %v326
    %v337 = vrcp.pop %v335
    %v338 = vmul.f32 %v311, %v336
    %v339 = vmul.f32 %v313, %v336
    %v340 = vmul.f32 %v315, %v337
    %v341 = vmul.f32 %v317, %v337
    %v343 = vsel %vm68, %v338, 0
    %v346 = vsel %vm68, %v339, 0
    %v349 = vsel %vm68, %v113, 0
    %v352 = vsel %vm68, %v114, 0
    %v355 = vsel %vm68, %v115, 0
    %v358 = vsel %vm68, %v116, 0
    %360 = vmatprep.subr.mxu0 0.0
    %361 = vmatpush1.xpose.msra.mxu0 0.0
    %362 = vmatprep.subr.mxu0 0.0
    %363 = vmatpush1.xpose.msra.mxu0 0.0
    %364 = vmatprep.subr.mxu0 0.0
    %365 = vmatpush1.xpose.msra.mxu0 0.0
    %366 = vmatprep.subr.mxu0 0.0
    %367 = vmatpush1.xpose.msra.mxu0 0.0
    %368 = vmatprep.subr.mxu0 0.0
    %369 = vmatpush1.xpose.msra.mxu0 0.0
    %370 = vmatprep.subr.mxu0 0.0
    %371 = vmatpush1.xpose.msra.mxu0 0.0
    %372 = vmatprep.subr.mxu0 0.0
    %373 = vmatpush1.xpose.msra.mxu0 0.0
    %374 = vmatprep.subr.mxu0 0.0
    %375 = vmatpush1.xpose.msra.mxu0 0.0
    %376 = vmatprep.subr.mxu0 0.0
    %377 = vmatpush1.xpose.msra.mxu0 0.0
    %378 = vmatprep.subr.mxu0 0.0
    %379 = vmatpush1.xpose.msra.mxu0 0.0
    %380 = vmatprep.subr.mxu0 0.0
    %381 = vmatpush1.xpose.msra.mxu0 0.0
    %382 = vmatprep.subr.mxu0 0.0
    %383 = vmatpush1.xpose.msra.mxu0 0.0
    %384 = vmatprep.subr.mxu0 0.0
    %385 = vmatpush1.xpose.msra.mxu0 %v358
    %386 = vmatprep.subr.mxu0 0.0
    %387 = vmatpush1.xpose.msra.mxu0 %v355
    %388 = vmatprep.subr.mxu0 0.0
    %389 = vmatpush1.xpose.msra.mxu0 %v352
    %390 = vmatprep.subr.mxu0 0.0
    %391 = vmatpush1.xpose.msra.mxu0 %v349
    %392 = vmatprep.subr.mxu0 0.0
    %393 = vmatpush2.xpose.msra.mxu0 0.0
    %394 = vmatprep.subr.mxu0 0.0
    %395 = vmatpush2.xpose.msra.mxu0 0.0
    %396 = vmatprep.subr.mxu0 0.0
    %397 = vmatpush2.xpose.msra.mxu0 0.0
    %398 = vmatprep.subr.mxu0 0.0
    %399 = vmatpush2.xpose.msra.mxu0 0.0
    %400 = vmatprep.subr.mxu0 0.0
    %401 = vmatpush2.xpose.msra.mxu0 0.0
    %402 = vmatprep.subr.mxu0 0.0
    %403 = vmatpush2.xpose.msra.mxu0 0.0
    %404 = vmatprep.subr.mxu0 0.0
    %405 = vmatpush2.xpose.msra.mxu0 0.0
    %406 = vmatprep.subr.mxu0 0.0
    %407 = vmatpush2.xpose.msra.mxu0 0.0
    %408 = vmatprep.subr.mxu0 0.0
    %409 = vmatpush2.xpose.msra.mxu0 0.0
    %410 = vmatprep.subr.mxu0 0.0
    %411 = vmatpush2.xpose.msra.mxu0 0.0
    %412 = vmatprep.subr.mxu0 0.0
    %413 = vmatpush2.xpose.msra.mxu0 0.0
    %414 = vmatprep.subr.mxu0 0.0
    %415 = vmatpush2.xpose.msra.mxu0 0.0
    %416 = vmatprep.subr.mxu0 0.0
    %417 = vmatpush2.xpose.msra.mxu0 0.0
    %418 = vmatprep.subr.mxu0 0.0
    %419 = vmatpush2.xpose.msra.mxu0 0.0
    %420 = vmatprep.subr.mxu0 0.0
    %421 = vmatpush2.xpose.msra.mxu0 0.0
    %422 = vmatprep.subr.mxu0 0.0
    %423 = vmatpush2.xpose.msra.mxu0 0.0
    %424 = vmatprep.mubr.f32.mxu0 0.0
    %425 = vmatmul.mubr.f32.gmra.mxu0 %v343
    %v426 = vpop.f32.mrf.mxu0
    %v427 = vadd.f32 0.0, %v426
    %v428 = vpop.f32.mrf.mxu0
    %429 = vmatprep.mubr.f32.mxu0 0.0
    %430 = vmatmul.mubr.f32.gmra.mxu0 %v346
    %v431 = vpop.f32.mrf.mxu0
    %v432 = vadd.f32 0.0, %v431
    %v433 = vpop.f32.mrf.mxu0
    %434 = vdwg.mxu0
    %v436 = vsel %vm68, %v340, 0
    %v439 = vsel %vm68, %v341, 0
    %v442 = vsel %vm68, %v117, 0
    %v445 = vsel %vm68, %v118, 0
    %v448 = vsel %vm68, %v119, 0
    %v451 = vsel %vm68, %v120, 0
    %453 = vmatprep.subr.mxu0 0.0
    %454 = vmatpush1.xpose.msra.mxu0 0.0
    %455 = vmatprep.subr.mxu0 0.0
    %456 = vmatpush1.xpose.msra.mxu0 0.0
    %457 = vmatprep.subr.mxu0 0.0
    %458 = vmatpush1.xpose.msra.mxu0 0.0
    %459 = vmatprep.subr.mxu0 0.0
    %460 = vmatpush1.xpose.msra.mxu0 0.0
    %461 = vmatprep.subr.mxu0 0.0
    %462 = vmatpush1.xpose.msra.mxu0 0.0
    %463 = vmatprep.subr.mxu0 0.0
    %464 = vmatpush1.xpose.msra.mxu0 0.0
    %465 = vmatprep.subr.mxu0 0.0
    %466 = vmatpush1.xpose.msra.mxu0 0.0
    %467 = vmatprep.subr.mxu0 0.0
    %468 = vmatpush1.xpose.msra.mxu0 0.0
    %469 = vmatprep.subr.mxu0 0.0
    %470 = vmatpush1.xpose.msra.mxu0 0.0
    %471 = vmatprep.subr.mxu0 0.0
    %472 = vmatpush1.xpose.msra.mxu0 0.0
    %473 = vmatprep.subr.mxu0 0.0
    %474 = vmatpush1.xpose.msra.mxu0 0.0
    %475 = vmatprep.subr.mxu0 0.0
    %476 = vmatpush1.xpose.msra.mxu0 0.0
    %477 = vmatprep.subr.mxu0 0.0
    %478 = vmatpush1.xpose.msra.mxu0 %v451
    %479 = vmatprep.subr.mxu0 0.0
    %480 = vmatpush1.xpose.msra.mxu0 %v448
    %481 = vmatprep.subr.mxu0 0.0
    %482 = vmatpush1.xpose.msra.mxu0 %v445
    %483 = vmatprep.subr.mxu0 0.0
    %484 = vmatpush1.xpose.msra.mxu0 %v442
    %485 = vmatprep.subr.mxu0 0.0
    %486 = vmatpush2.xpose.msra.mxu0 0.0
    %487 = vmatprep.subr.mxu0 0.0
    %488 = vmatpush2.xpose.msra.mxu0 0.0
    %489 = vmatprep.subr.mxu0 0.0
    %490 = vmatpush2.xpose.msra.mxu0 0.0
    %491 = vmatprep.subr.mxu0 0.0
    %492 = vmatpush2.xpose.msra.mxu0 0.0
    %493 = vmatprep.subr.mxu0 0.0
    %494 = vmatpush2.xpose.msra.mxu0 0.0
    %495 = vmatprep.subr.mxu0 0.0
    %496 = vmatpush2.xpose.msra.mxu0 0.0
    %497 = vmatprep.subr.mxu0 0.0
    %498 = vmatpush2.xpose.msra.mxu0 0.0
    %499 = vmatprep.subr.mxu0 0.0
    %500 = vmatpush2.xpose.msra.mxu0 0.0
    %501 = vmatprep.subr.mxu0 0.0
    %502 = vmatpush2.xpose.msra.mxu0 0.0
    %503 = vmatprep.subr.mxu0 0.0
    %504 = vmatpush2.xpose.msra.mxu0 0.0
    %505 = vmatprep.subr.mxu0 0.0
    %506 = vmatpush2.xpose.msra.mxu0 0.0
    %507 = vmatprep.subr.mxu0 0.0
    %508 = vmatpush2.xpose.msra.mxu0 0.0
    %509 = vmatprep.subr.mxu0 0.0
    %510 = vmatpush2.xpose.msra.mxu0 0.0
    %511 = vmatprep.subr.mxu0 0.0
    %512 = vmatpush2.xpose.msra.mxu0 0.0
    %513 = vmatprep.subr.mxu0 0.0
    %514 = vmatpush2.xpose.msra.mxu0 0.0
    %515 = vmatprep.subr.mxu0 0.0
    %516 = vmatpush2.xpose.msra.mxu0 0.0
    %517 = vmatprep.mubr.f32.mxu0 0.0
    %518 = vmatmul.mubr.f32.gmra.mxu0 %v436
    %v519 = vpop.f32.mrf.mxu0
    %v520 = vadd.f32 0.0, %v519
    %v521 = vpop.f32.mrf.mxu0
    %522 = vmatprep.mubr.f32.mxu0 0.0
    %523 = vmatmul.mubr.f32.gmra.mxu0 %v439
    %v524 = vpop.f32.mrf.mxu0
    %v525 = vadd.f32 0.0, %v524
    %v526 = vpop.f32.mrf.mxu0
    %527 = vdwg.mxu0
    %v528 = vsel %vm68, %v338, 0.0
    %529 = vadd.xlane.f32.xlu0 %v528
    %v530 = vpop.xlane.xlu0 %529
    %v531 = vsel %vm68, %v339, 0.0
    %532 = vadd.xlane.f32.xlu0 %v531
    %v533 = vpop.xlane.xlu0 %532
    %v534 = vsel %vm68, %v340, 0.0
    %535 = vadd.xlane.f32.xlu0 %v534
    %v536 = vpop.xlane.xlu0 %535
    %v537 = vsel %vm68, %v341, 0.0
    %538 = vadd.xlane.f32.xlu0 %v537
    %v539 = vpop.xlane.xlu0 %538
    %v540 = vmul.f32 %v530, %v56
    %v541 = vmul.f32 %v533, %v57
    %v542 = vmul.f32 %v536, %v56
    %v543 = vmul.f32 %v539, %v57
    %v544 = vsub.f32 %v427, %v540
    %v545 = vsub.f32 %v432, %v541
    %v546 = vsub.f32 %v520, %v542
    %v547 = vsub.f32 %v525, %v543
    %v548 = vmul.f32 %v544, %v544
    %v549 = vmul.f32 %v545, %v545
    %v550 = vmul.f32 %v546, %v546
    %v551 = vmul.f32 %v547, %v547
    %v552 = vsel %vm131, %v548, 0.0
    %553 = vadd.xlane.f32.xlu0 %v552
    %v554 = vpop.xlane.xlu0 %553
    %v555 = vsel %vm131, %v549, 0.0
    %556 = vadd.xlane.f32.xlu0 %v555
    %v557 = vpop.xlane.xlu0 %556
    %v558 = vsel %vm131, %v550, 0.0
    %559 = vadd.xlane.f32.xlu0 %v558
    %v560 = vpop.xlane.xlu0 %559
    %v561 = vsel %vm131, %v551, 0.0
    %562 = vadd.xlane.f32.xlu0 %v561
    %v563 = vpop.xlane.xlu0 %562
    %v564 = vrsqrt.pop %v554
    %v565 = vmul.f32 %v554, %v564
    %vm566 = vcmp.eq.f32.partialorder %v554, inf
    %v567 = vsel %vm566, %v554, %v565
    %vm568 = vcmp.eq.f32.partialorder %v554, 0.0
    %v569 = vand.u32 %v554, 2147483648
    %v570 = vsel %vm568, %v569, %v567
    %v571 = vrsqrt.pop %v557
    %v572 = vmul.f32 %v557, %v571
    %vm573 = vcmp.eq.f32.partialorder %v557, inf
    %v574 = vsel %vm573, %v557, %v572
    %vm575 = vcmp.eq.f32.partialorder %v557, 0.0
    %v576 = vand.u32 %v557, 2147483648
    %v577 = vsel %vm575, %v576, %v574
    %v578 = vrsqrt.pop %v560
    %v579 = vmul.f32 %v560, %v578
    %vm580 = vcmp.eq.f32.partialorder %v560, inf
    %v581 = vsel %vm580, %v560, %v579
    %vm582 = vcmp.eq.f32.partialorder %v560, 0.0
    %v583 = vand.u32 %v560, 2147483648
    %v584 = vsel %vm582, %v583, %v581
    %v585 = vrsqrt.pop %v563
    %v586 = vmul.f32 %v563, %v585
    %vm587 = vcmp.eq.f32.partialorder %v563, inf
    %v588 = vsel %vm587, %v563, %v586
    %vm589 = vcmp.eq.f32.partialorder %v563, 0.0
    %v590 = vand.u32 %v563, 2147483648
    %v591 = vsel %vm589, %v590, %v588
    %v592 = vmax.f32 %v570, 1e-12
    %v593 = vmax.f32 %v577, 1e-12
    %v594 = vmax.f32 %v584, 1e-12
    %v595 = vmax.f32 %v591, 1e-12
    %v596 = vrcp.pop %v592
    %v597 = vrcp.pop %v593
    %v598 = vrcp.pop %v594
    %v599 = vrcp.pop %v595
    %v600 = vmul.f32 %v544, %v596
    %v601 = vmul.f32 %v545, %v597
    %v602 = vmul.f32 %v546, %v598
    %v603 = vmul.f32 %v547, %v599
    %v604 = vmul.f32 %v600, %v600
    %v605 = vmul.f32 %v601, %v601
    %v606 = vmul.f32 %v602, %v602
    %v607 = vmul.f32 %v603, %v603
    %v608 = vsel %vm131, %v604, 0.0
    %609 = vadd.xlane.f32.xlu0 %v608
    %v610 = vpop.xlane.xlu0 %609
    %v611 = vsel %vm131, %v605, 0.0
    %612 = vadd.xlane.f32.xlu0 %v611
    %v613 = vpop.xlane.xlu0 %612
    %v614 = vsel %vm131, %v606, 0.0
    %615 = vadd.xlane.f32.xlu0 %v614
    %v616 = vpop.xlane.xlu0 %615
    %v617 = vsel %vm131, %v607, 0.0
    %618 = vadd.xlane.f32.xlu0 %v617
    %v619 = vpop.xlane.xlu0 %618
    %v620 = vadd.f32 %v610, %v613
    %v621 = vrot.slane %v620, 4
    %v622 = vadd.f32 %v620, %v621
    %v623 = vrot.slane %v622, 2
    %v624 = vadd.f32 %v622, %v623
    %v625 = vrot.slane %v624, 1
    %v626 = vadd.f32 %v624, %v625
    %v627 = vadd.f32 %v616, %v619
    %v628 = vrot.slane %v627, 4
    %v629 = vadd.f32 %v627, %v628
    %v630 = vrot.slane %v629, 2
    %v631 = vadd.f32 %v629, %v630
    %v632 = vrot.slane %v631, 1
    %v633 = vadd.f32 %v631, %v632
    %v634 = vrsqrt.pop %v626
    %v635 = vmul.f32 %v626, %v634
    %vm636 = vcmp.eq.f32.partialorder %v626, inf
    %v637 = vsel %vm636, %v626, %v635
    %vm638 = vcmp.eq.f32.partialorder %v626, 0.0
    %v639 = vand.u32 %v626, 2147483648
    %v640 = vsel %vm638, %v639, %v637
    %v641 = vrsqrt.pop %v633
    %v642 = vmul.f32 %v633, %v641
    %vm643 = vcmp.eq.f32.partialorder %v633, inf
    %v644 = vsel %vm643, %v633, %v642
    %vm645 = vcmp.eq.f32.partialorder %v633, 0.0
    %v646 = vand.u32 %v633, 2147483648
    %v647 = vsel %vm645, %v646, %v644
    %v648 = vmax.f32 %v640, 1e-12
    %v649 = vmax.f32 %v647, 1e-12
    %v650 = vrcp.pop %v648
    %v651 = vrcp.pop %v649
    %v652 = vmul.f32 %v600, %v650
    %v653 = vmul.f32 %v601, %v650
    %v654 = vmul.f32 %v602, %v651
    %v655 = vmul.f32 %v603, %v651
    %656 = vst.msk [vmem:[#allocation7] sm:$0xff] %vm131, %v652
    %657 = vst.msk [vmem:[#allocation7 + $0x8] sm:$0xff] %vm131, %v653
    %658 = vst.msk [vmem:[#allocation7 + $0x10] sm:$0xff] %vm131, %v654
    %659 = vst.msk [vmem:[#allocation7 + $0x18] sm:$0xff] %vm131, %v655
    // Predicated region
    $region26: #{tpu_custom_call.1} parent=1 // pred_check
      _
    $region27: #{tpu_custom_call.1} parent=1 // pred_check_branch
      %661 = sbr.rel (0) target = $region29
    $region28: #{tpu_custom_call.1} parent=1 // pred_region
      %s663 = ssub.s32 512, 512
      %664 = vsyncadd [#allocation4], %s663
      %s665 = sshll.u32 [#allocation7], 4
      %s666 = int_to_ptr.vmem [resolvable:$true] %s665
      %671 = dma.vmem_to_hbm [thread:$0]  %s666, 512, %s4, [#allocation4], 128, 128, 8
    $region29: #{tpu_custom_call.1} parent=1 // pred_fallthru
      _
    // Predicated region
    $region30: #{tpu_custom_call.1} parent=1 // pred_check
      _
    $region31: #{tpu_custom_call.1} parent=1 // pred_check_branch
      %673 = sbr.rel (0) target = $region33
    $region32: #{tpu_custom_call.1} parent=1 // pred_region
      %674 = dma.done [#allocation4], 512
    $region33: #{tpu_custom_call.1} parent=1 // pred_fallthru
      _
    %675 = vsyncpa [#allocation3], 1
    %676 = vsyncpa [#allocation6], 1
    %677 = vsyncpa [#allocation4], 1

</llo_original>
